<compile_context>
chip_gen: v7x
topology: tpu7x:2x2x1
jax: 0.10.0
libtpu: 0.0.40
codegen_flags: <defaults>
</compile_context>

<pallas_src>
import functools

import jax
import jax.numpy as jnp
from jax.experimental import pallas as pl
from jax.experimental.pallas import tpu as pltpu

LEN_INDEX = 20
IN_DIM = LEN_INDEX - 1          # 19
H1, H2, H3, OUT = 32, 64, 22, 2
NEG_SLOPE = 0.01                # nn.LeakyReLU default
BN_EPS = 1e-5

DEFAULT_TILE_B = 4096           # sweep 2048-8192; amortizes ~0.35us/grid-step
MAX_TILE_B = 8192               # v7x VMEM-safe cap (64 MiB phys / 32 MiB scoped)


def _leaky_relu(v):
    # max(v, a*v) == leaky_relu(v) for 0 < a < 1; 2 VPU ops/elem instead of 3.
    return jnp.maximum(v, NEG_SLOPE * v)


def _mlp_kernel(x_ref,
                w1_ref, b1_ref, w2_ref, b2_ref,
                w3_ref, b3_ref, w4_ref, b4_ref,
                oT_ref):
    # x arrives batch-major [TILE_B, 19] (contiguous DMA from the [B,19] HBM
    # array).  Flip to feature-major on the XLU so the batch sits on the
    # 128-lane axis for every matmul / elementwise op / store.
    xT = jnp.transpose(x_ref[...].astype(jnp.float32))               # [19, TB]
    h1 = _leaky_relu(
        jnp.dot(w1_ref[...], xT, preferred_element_type=jnp.float32)
        + b1_ref[...])                                               # [32, TB]
    h2 = _leaky_relu(
        jnp.dot(w2_ref[...], h1, preferred_element_type=jnp.float32)
        + b2_ref[...])                                               # [64, TB]
    h3 = _leaky_relu(
        jnp.dot(w3_ref[...], h2, preferred_element_type=jnp.float32)
        + b3_ref[...])                                               # [22, TB]
    oT_ref[...] = (
        jnp.dot(w4_ref[...], h3, preferred_element_type=jnp.float32)
        + b4_ref[...])                                               # [ 2, TB]


def _fold_bn(w, b, gamma, beta, mean, var):
    """Fold eval-mode BatchNorm1d into the preceding Linear: y = x@W' + b'."""
    s = gamma / jnp.sqrt(var + BN_EPS)
    w_f = w * s[None, :]
    b_f = b * s + (beta - mean * s)
    return w_f, b_f


def _round_up(n, m):
    return ((n + m - 1) // m) * m


@functools.partial(
    jax.jit,
    static_argnames=("tile_b", "feature_major_out", "compute_dtype",
                     "core_parallel"))
def binary_classification_forward(x, params, tile_b=DEFAULT_TILE_B,
                                  feature_major_out=False,
                                  compute_dtype=jnp.float32,
                                  core_parallel=False):
    (w1, b1, g1, be1, m1, v1,
     w2, b2, g2, be2, m2, v2,
     w3, b3, g3, be3, m3, v3,
     w4, b4) = params

    w1f, b1f = _fold_bn(w1, b1, g1, be1, m1, v1)
    w2f, b2f = _fold_bn(w2, b2, g2, be2, m2, v2)
    w3f, b3f = _fold_bn(w3, b3, g3, be3, m3, v3)

    B = x.shape[0]
    # Batch tile: no bigger than the (rounded-up) batch, a multiple of 256
    # (full MXU column passes on v6e/v7x), capped for v7x VMEM headroom.
    tile_b = _round_up(min(tile_b, _round_up(max(B, 1), 256)), 256)
    tile_b = min(tile_b, MAX_TILE_B)
    b_pad = _round_up(max(B, 1), tile_b)
    n_tiles = b_pad // tile_b

    # Input streams in its HBM layout; optional bf16 stream halves input
    # traffic on bandwidth-starved v5e (accumulation stays f32 in-kernel).
    x = x.astype(compute_dtype)
    if b_pad != B:
        # Contiguous row-append only when actually needed; padded rows compute
        # bias-only garbage and are sliced off below.
        x = jnp.pad(x, ((0, b_pad - B), (0, 0)))

    # Weights as [out, in]; biases as [out, 1] (broadcast over the lane/batch
    # axis).  Constant index_maps keep them VMEM-resident across the grid.
    args = (x,
            w1f.T, b1f[:, None],
            w2f.T, b2f[:, None],
            w3f.T, b3f[:, None],
            w4.T,  b4[:, None])

    const = lambda i: (0, 0)
    in_specs = [
        pl.BlockSpec((tile_b, IN_DIM), lambda i: (i, 0)),   # x tiles stream
        pl.BlockSpec((H1, IN_DIM), const), pl.BlockSpec((H1, 1), const),
        pl.BlockSpec((H2, H1), const),     pl.BlockSpec((H2, 1), const),
        pl.BlockSpec((H3, H2), const),     pl.BlockSpec((H3, 1), const),
        pl.BlockSpec((OUT, H3), const),    pl.BlockSpec((OUT, 1), const),
    ]
    out_spec = pl.BlockSpec((OUT, tile_b), lambda i: (0, i))  # lane-dense store

    # Default "parallel" is safe everywhere; CORE_PARALLEL shards the
    # batch-tile axis across the 2 TensorCores on v7x (use n_tiles >= 2, even).
    dim_sem = (pltpu.CORE_PARALLEL,) if core_parallel else ("parallel",)

    oT = pl.pallas_call(
        _mlp_kernel,
        out_shape=jax.ShapeDtypeStruct((OUT, b_pad), jnp.float32),
        grid=(n_tiles,),
        in_specs=in_specs,
        out_specs=out_spec,
        compiler_params=pltpu.CompilerParams(dimension_semantics=dim_sem),
    )(*args)

    oT = oT[:, :B]                        # drop padded batch columns
    if feature_major_out:
        return oT                         # [2, B] — no extra transpose kernel
    return oT.T                           # [B, 2] — PyTorch-parity layout


def init_params(key):
    ks = jax.random.split(key, 8)

    def linear(kw, kb, fan_in, fan_out):
        bound = 1.0 / jnp.sqrt(fan_in)
        w = jax.random.uniform(kw, (fan_in, fan_out), jnp.float32, -bound, bound)
        b = jax.random.uniform(kb, (fan_out,), jnp.float32, -bound, bound)
        return w, b

    def bn(dim):
        # PyTorch BatchNorm1d init: gamma=1, beta=0, running_mean=0, running_var=1.
        return (jnp.ones((dim,), jnp.float32), jnp.zeros((dim,), jnp.float32),
                jnp.zeros((dim,), jnp.float32), jnp.ones((dim,), jnp.float32))

    w1, b1 = linear(ks[0], ks[1], IN_DIM, H1)
    w2, b2 = linear(ks[2], ks[3], H1, H2)
    w3, b3 = linear(ks[4], ks[5], H2, H3)
    w4, b4 = linear(ks[6], ks[7], H3, OUT)

    g1, be1, m1, v1 = bn(H1)
    g2, be2, m2, v2 = bn(H2)
    g3, be3, m3, v3 = bn(H3)

    return (w1, b1, g1, be1, m1, v1,
            w2, b2, g2, be2, m2, v2,
            w3, b3, g3, be3, m3, v3,
            w4, b4)


def _reference_forward(x, params):
    (w1, b1, g1, be1, m1, v1,
     w2, b2, g2, be2, m2, v2,
     w3, b3, g3, be3, m3, v3,
     w4, b4) = params

    def block(h, w, b, g, be, m, v):
        z = h @ w + b
        z = (z - m) / jnp.sqrt(v + BN_EPS) * g + be
        # Dropout is identity in eval mode.
        return jnp.where(z > 0, z, NEG_SLOPE * z)

    h = block(x, w1, b1, g1, be1, m1, v1)
    h = block(h, w2, b2, g2, be2, m2, v2)
    h = block(h, w3, b3, g3, be3, m3, v3)
    return h @ w4 + b4


if __name__ == "__main__":
    key = jax.random.PRNGKey(0)
    kp, kx1, kx2 = jax.random.split(key, 3)
    params = init_params(kp)

    # Small single-tile case (tile clamps to 256; batch padded 8 -> 256).
    batch = 8
    x = jax.random.normal(kx1, (batch, IN_DIM), dtype=jnp.float32)
    out = jax.block_until_ready(binary_classification_forward(x, params))
    ref = _reference_forward(x, params)
    assert out.shape == (batch, OUT)
    assert jnp.allclose(out, ref, atol=2e-5, rtol=2e-5), "mismatch (small)"

    # Multi-tile case with padding (300 -> 2 tiles of 256, pad to 512).
    batch2 = 300
    x2 = jax.random.normal(kx2, (batch2, IN_DIM), dtype=jnp.float32)
    out2 = jax.block_until_ready(
        binary_classification_forward(x2, params, tile_b=256))
    ref2 = _reference_forward(x2, params)
    assert out2.shape == (batch2, OUT)
    assert jnp.allclose(out2, ref2, atol=2e-5, rtol=2e-5), "mismatch (tiled)"

    # Feature-major output path: consumer takes [2, B], no final transpose.
    out_fm = jax.block_until_ready(
        binary_classification_forward(x2, params, tile_b=256,
                                      feature_major_out=True))
    assert out_fm.shape == (OUT, batch2)
    assert jnp.allclose(out_fm.T, ref2, atol=2e-5, rtol=2e-5), "mismatch (fm)"

    # bf16 input stream (v5e bandwidth path); f32 accumulation, loose parity.
    out_bf = jax.block_until_ready(
        binary_classification_forward(x, params, compute_dtype=jnp.bfloat16))
    assert out_bf.shape == (batch, OUT)
    assert jnp.allclose(out_bf, ref, atol=5e-2, rtol=5e-2), "mismatch (bf16)"

    print("KERNEL_OK")
</pallas_src>

<mosaic_0001>
module attributes {stable_mosaic.version = 11 : i64} {
  func.func @_mlp_kernel(%arg0: i32, %arg1: memref<256x19xf32, #tpu.memory_space<vmem>>, %arg2: memref<32x19xf32, #tpu.memory_space<vmem>>, %arg3: memref<32x1xf32, #tpu.memory_space<vmem>>, %arg4: memref<64x32xf32, #tpu.memory_space<vmem>>, %arg5: memref<64x1xf32, #tpu.memory_space<vmem>>, %arg6: memref<22x64xf32, #tpu.memory_space<vmem>>, %arg7: memref<22x1xf32, #tpu.memory_space<vmem>>, %arg8: memref<2x22xf32, #tpu.memory_space<vmem>>, %arg9: memref<2x1xf32, #tpu.memory_space<vmem>>, %arg10: memref<2x256xf32, #tpu.memory_space<vmem>>) attributes {dimension_semantics = [#tpu.dimension_semantics<parallel>], iteration_bounds = array<i64: 1>, scalar_prefetch = 0 : i64, scratch_operands = 0 : i64, tpu.core_type = #tpu.core_type<tc>, window_params = [{transform_indices = @transform_0, window_bounds = array<i64: 256, 19>}, {pipeline_mode = #tpu.pipeline_mode<synchronous>, transform_indices = @transform_1, window_bounds = array<i64: 32, 19>}, {pipeline_mode = #tpu.pipeline_mode<synchronous>, transform_indices = @transform_2, window_bounds = array<i64: 32, 1>}, {pipeline_mode = #tpu.pipeline_mode<synchronous>, transform_indices = @transform_3, window_bounds = array<i64: 64, 32>}, {pipeline_mode = #tpu.pipeline_mode<synchronous>, transform_indices = @transform_4, window_bounds = array<i64: 64, 1>}, {pipeline_mode = #tpu.pipeline_mode<synchronous>, transform_indices = @transform_5, window_bounds = array<i64: 22, 64>}, {pipeline_mode = #tpu.pipeline_mode<synchronous>, transform_indices = @transform_6, window_bounds = array<i64: 22, 1>}, {pipeline_mode = #tpu.pipeline_mode<synchronous>, transform_indices = @transform_7, window_bounds = array<i64: 2, 22>}, {pipeline_mode = #tpu.pipeline_mode<synchronous>, transform_indices = @transform_8, window_bounds = array<i64: 2, 1>}, {transform_indices = @transform_9, window_bounds = array<i64: 2, 256>}]} {
    %c0 = arith.constant 0 : index
    %c0_0 = arith.constant 0 : index
    %0 = vector.load %arg1[%c0, %c0_0] : memref<256x19xf32, #tpu.memory_space<vmem>>, vector<256x19xf32>
    %1 = tpu.transpose %0, [1, 0] : vector<256x19xf32> -> vector<19x256xf32>
    %c0_1 = arith.constant 0 : index
    %c0_2 = arith.constant 0 : index
    %2 = vector.load %arg2[%c0_1, %c0_2] : memref<32x19xf32, #tpu.memory_space<vmem>>, vector<32x19xf32>
    %cst = arith.constant dense<0.000000e+00> : vector<32x256xf32>
    %3 = tpu.matmul %2, %1, %cst {dimension_numbers = #tpu.dot_dimension_numbers<[1], [0], [0], [1], [0, 0, 1, 1], [], []>} : vector<32x19xf32>, vector<19x256xf32>, vector<32x256xf32> -> vector<32x256xf32>
    %c0_3 = arith.constant 0 : index
    %c0_4 = arith.constant 0 : index
    %4 = vector.load %arg3[%c0_3, %c0_4] : memref<32x1xf32, #tpu.memory_space<vmem>>, vector<32x1xf32>
    %5 = vector.broadcast %4 : vector<32x1xf32> to vector<32x256xf32>
    %6 = arith.addf %3, %5 : vector<32x256xf32>
    %cst_5 = arith.constant 0.00999999977 : f32
    %7 = vector.broadcast %cst_5 : f32 to vector<32x256xf32>
    %8 = arith.mulf %7, %6 : vector<32x256xf32>
    %9 = arith.maximumf %6, %8 : vector<32x256xf32>
    %c0_6 = arith.constant 0 : index
    %c0_7 = arith.constant 0 : index
    %10 = vector.load %arg4[%c0_6, %c0_7] : memref<64x32xf32, #tpu.memory_space<vmem>>, vector<64x32xf32>
    %cst_8 = arith.constant dense<0.000000e+00> : vector<64x256xf32>
    %11 = tpu.matmul %10, %9, %cst_8 {dimension_numbers = #tpu.dot_dimension_numbers<[1], [0], [0], [1], [0, 0, 1, 1], [], []>} : vector<64x32xf32>, vector<32x256xf32>, vector<64x256xf32> -> vector<64x256xf32>
    %c0_9 = arith.constant 0 : index
    %c0_10 = arith.constant 0 : index
    %12 = vector.load %arg5[%c0_9, %c0_10] : memref<64x1xf32, #tpu.memory_space<vmem>>, vector<64x1xf32>
    %13 = vector.broadcast %12 : vector<64x1xf32> to vector<64x256xf32>
    %14 = arith.addf %11, %13 : vector<64x256xf32>
    %cst_11 = arith.constant 0.00999999977 : f32
    %15 = vector.broadcast %cst_11 : f32 to vector<64x256xf32>
    %16 = arith.mulf %15, %14 : vector<64x256xf32>
    %17 = arith.maximumf %14, %16 : vector<64x256xf32>
    %c0_12 = arith.constant 0 : index
    %c0_13 = arith.constant 0 : index
    %18 = vector.load %arg6[%c0_12, %c0_13] : memref<22x64xf32, #tpu.memory_space<vmem>>, vector<22x64xf32>
    %cst_14 = arith.constant dense<0.000000e+00> : vector<22x256xf32>
    %19 = tpu.matmul %18, %17, %cst_14 {dimension_numbers = #tpu.dot_dimension_numbers<[1], [0], [0], [1], [0, 0, 1, 1], [], []>} : vector<22x64xf32>, vector<64x256xf32>, vector<22x256xf32> -> vector<22x256xf32>
    %c0_15 = arith.constant 0 : index
    %c0_16 = arith.constant 0 : index
    %20 = vector.load %arg7[%c0_15, %c0_16] : memref<22x1xf32, #tpu.memory_space<vmem>>, vector<22x1xf32>
    %21 = vector.broadcast %20 : vector<22x1xf32> to vector<22x256xf32>
    %22 = arith.addf %19, %21 : vector<22x256xf32>
    %cst_17 = arith.constant 0.00999999977 : f32
    %23 = vector.broadcast %cst_17 : f32 to vector<22x256xf32>
    %24 = arith.mulf %23, %22 : vector<22x256xf32>
    %25 = arith.maximumf %22, %24 : vector<22x256xf32>
    %c0_18 = arith.constant 0 : index
    %c0_19 = arith.constant 0 : index
    %26 = vector.load %arg8[%c0_18, %c0_19] : memref<2x22xf32, #tpu.memory_space<vmem>>, vector<2x22xf32>
    %cst_20 = arith.constant dense<0.000000e+00> : vector<2x256xf32>
    %27 = tpu.matmul %26, %25, %cst_20 {dimension_numbers = #tpu.dot_dimension_numbers<[1], [0], [0], [1], [0, 0, 1, 1], [], []>} : vector<2x22xf32>, vector<22x256xf32>, vector<2x256xf32> -> vector<2x256xf32>
    %c0_21 = arith.constant 0 : index
    %c0_22 = arith.constant 0 : index
    %28 = vector.load %arg9[%c0_21, %c0_22] : memref<2x1xf32, #tpu.memory_space<vmem>>, vector<2x1xf32>
    %29 = vector.broadcast %28 : vector<2x1xf32> to vector<2x256xf32>
    %30 = arith.addf %27, %29 : vector<2x256xf32>
    %c0_23 = arith.constant 0 : index
    %c0_24 = arith.constant 0 : index
    %31 = vector.load %arg10[%c0_23, %c0_24] : memref<2x256xf32, #tpu.memory_space<vmem>>, vector<2x256xf32>
    tpu.vector_store %arg10[%c0_23, %c0_24], %30 {strides = array<i32>} : memref<2x256xf32, #tpu.memory_space<vmem>>, vector<2x256xf32>,
    return
  }
  func.func @transform_0(%arg0: i32) -> (i32, i32) {
    %c0_i32 = arith.constant 0 : i32
    %c0_i32_0 = arith.constant 0 : i32
    return %arg0, %c0_i32 : i32, i32
  }
  func.func @transform_1(%arg0: i32) -> (i32, i32) {
    %c0_i32 = arith.constant 0 : i32
    %c0_i32_0 = arith.constant 0 : i32
    %c0_i32_1 = arith.constant 0 : i32
    return %c0_i32, %c0_i32_0 : i32, i32
  }
  func.func @transform_2(%arg0: i32) -> (i32, i32) {
    %c0_i32 = arith.constant 0 : i32
    %c0_i32_0 = arith.constant 0 : i32
    %c0_i32_1 = arith.constant 0 : i32
    return %c0_i32, %c0_i32_0 : i32, i32
  }
  func.func @transform_3(%arg0: i32) -> (i32, i32) {
    %c0_i32 = arith.constant 0 : i32
    %c0_i32_0 = arith.constant 0 : i32
    %c0_i32_1 = arith.constant 0 : i32
    return %c0_i32, %c0_i32_0 : i32, i32
  }
  func.func @transform_4(%arg0: i32) -> (i32, i32) {
    %c0_i32 = arith.constant 0 : i32
    %c0_i32_0 = arith.constant 0 : i32
    %c0_i32_1 = arith.constant 0 : i32
    return %c0_i32, %c0_i32_0 : i32, i32
  }
  func.func @transform_5(%arg0: i32) -> (i32, i32) {
    %c0_i32 = arith.constant 0 : i32
    %c0_i32_0 = arith.constant 0 : i32
    %c0_i32_1 = arith.constant 0 : i32
    return %c0_i32, %c0_i32_0 : i32, i32
  }
  func.func @transform_6(%arg0: i32) -> (i32, i32) {
    %c0_i32 = arith.constant 0 : i32
    %c0_i32_0 = arith.constant 0 : i32
    %c0_i32_1 = arith.constant 0 : i32
    return %c0_i32, %c0_i32_0 : i32, i32
  }
  func.func @transform_7(%arg0: i32) -> (i32, i32) {
    %c0_i32 = arith.constant 0 : i32
    %c0_i32_0 = arith.constant 0 : i32
    %c0_i32_1 = arith.constant 0 : i32
    return %c0_i32, %c0_i32_0 : i32, i32
  }
  func.func @transform_8(%arg0: i32) -> (i32, i32) {
    %c0_i32 = arith.constant 0 : i32
    %c0_i32_0 = arith.constant 0 : i32
    %c0_i32_1 = arith.constant 0 : i32
    return %c0_i32, %c0_i32_0 : i32, i32
  }
  func.func @transform_9(%arg0: i32) -> (i32, i32) {
    %c0_i32 = arith.constant 0 : i32
    %c0_i32_0 = arith.constant 0 : i32
    return %c0_i32, %arg0 : i32, i32
  }
}

</mosaic_0001>

<llo_original>
// kernel: binary_classification_forward.1
$region0: #{binary_classification_forward.1}
  #allocation0 [shape = 'u32[]', space=smem, size = 0x4, offset = 0x4, fixed_abs, tag = 'smem constant byte address 0x4 - core index']
  #allocation1 [shape = 'u32[144,128]{1,0:T(1,128)}', space=vmem, size = 0x12000, scoped, tag = 'internal scratch']
  %s0 = inlined_call_operand.vmem [shape: f32[256,19], index: 0, kind: input, shape index: {}]
  %s1 = inlined_call_operand.vmem [shape: f32[32,19], index: 1, kind: input, shape index: {}]
  %s2 = inlined_call_operand.vmem [shape: f32[32,1], index: 2, kind: input, shape index: {}]
  %s3 = inlined_call_operand.vmem [shape: f32[64,32], index: 3, kind: input, shape index: {}]
  %s4 = inlined_call_operand.vmem [shape: f32[64,1], index: 4, kind: input, shape index: {}]
  %s5 = inlined_call_operand.vmem [shape: f32[22,64], index: 5, kind: input, shape index: {}]
  %s6 = inlined_call_operand.vmem [shape: f32[22,1], index: 6, kind: input, shape index: {}]
  %s7 = inlined_call_operand.vmem [shape: f32[2,22], index: 7, kind: input, shape index: {}]
  %s8 = inlined_call_operand.vmem [shape: f32[2,1], index: 8, kind: input, shape index: {}]
  %s9 = inlined_call_operand.vmem [shape: f32[2,256], index: 9, kind: output, shape index: {}]
  %s10 = sld [smem:[#allocation0]]
  $region46: #{binary_classification_forward.1} parent=0
    _
  %s12 = ssub.s32 1, %s10
  %s13 = scalar_select 0, %s12, %s10
  // Predicated region
  $region2: #{binary_classification_forward.1} parent=0 // pred_check
    _
  $region3: #{binary_classification_forward.1} parent=0 // pred_check_branch
    %15 = sbr.rel (0) target = $region5
  $region4: #{binary_classification_forward.1} parent=0 // pred_region
    _
  $region5: #{binary_classification_forward.1} parent=0 // pred_fallthru
    _
  // Predicated region
  $region6: #{binary_classification_forward.1} parent=0 // pred_check
    _
  $region7: #{binary_classification_forward.1} parent=0 // pred_check_branch
    %17 = sbr.rel (0) target = $region9
  $region8: #{binary_classification_forward.1} parent=0 // pred_region
    _
  $region9: #{binary_classification_forward.1} parent=0 // pred_fallthru
    _
  // Predicated region
  $region10: #{binary_classification_forward.1} parent=0 // pred_check
    _
  $region11: #{binary_classification_forward.1} parent=0 // pred_check_branch
    %19 = sbr.rel (0) target = $region13
  $region12: #{binary_classification_forward.1} parent=0 // pred_region
    _
  $region13: #{binary_classification_forward.1} parent=0 // pred_fallthru
    _
  // Predicated region
  $region14: #{binary_classification_forward.1} parent=0 // pred_check
    _
  $region15: #{binary_classification_forward.1} parent=0 // pred_check_branch
    %21 = sbr.rel (0) target = $region17
  $region16: #{binary_classification_forward.1} parent=0 // pred_region
    _
  $region17: #{binary_classification_forward.1} parent=0 // pred_fallthru
    _
  // Predicated region
  $region18: #{binary_classification_forward.1} parent=0 // pred_check
    _
  $region19: #{binary_classification_forward.1} parent=0 // pred_check_branch
    %23 = sbr.rel (0) target = $region21
  $region20: #{binary_classification_forward.1} parent=0 // pred_region
    _
  $region21: #{binary_classification_forward.1} parent=0 // pred_fallthru
    _
  // Predicated region
  $region22: #{binary_classification_forward.1} parent=0 // pred_check
    _
  $region23: #{binary_classification_forward.1} parent=0 // pred_check_branch
    %25 = sbr.rel (0) target = $region25
  $region24: #{binary_classification_forward.1} parent=0 // pred_region
    _
  $region25: #{binary_classification_forward.1} parent=0 // pred_fallthru
    _
  // Predicated region
  $region26: #{binary_classification_forward.1} parent=0 // pred_check
    _
  $region27: #{binary_classification_forward.1} parent=0 // pred_check_branch
    %27 = sbr.rel (0) target = $region29
  $region28: #{binary_classification_forward.1} parent=0 // pred_region
    _
  $region29: #{binary_classification_forward.1} parent=0 // pred_fallthru
    _
  // Predicated region
  $region30: #{binary_classification_forward.1} parent=0 // pred_check
    _
  $region31: #{binary_classification_forward.1} parent=0 // pred_check_branch
    %29 = sbr.rel (0) target = $region33
  $region32: #{binary_classification_forward.1} parent=0 // pred_region
    _
  $region33: #{binary_classification_forward.1} parent=0 // pred_fallthru
    _
  // Predicated region
  $region34: #{binary_classification_forward.1} parent=0 // pred_check
    _
  $region35: #{binary_classification_forward.1} parent=0 // pred_check_branch
    %31 = sbr.rel (0) target = $region37
  $region36: #{binary_classification_forward.1} parent=0 // pred_region
    _
  $region37: #{binary_classification_forward.1} parent=0 // pred_fallthru
    _
  %v32 = vld [vmem:[%s0] sm:$0xff]
  %v33 = vld [vmem:[%s0 + $0x8] sm:$0xff]
  %v34 = vld [vmem:[%s0 + $0x10] sm:$0xff]
  %v35 = vld [vmem:[%s0 + $0x18] sm:$0xff]
  %v36 = vld [vmem:[%s0 + $0x20] sm:$0xff]
  %v37 = vld [vmem:[%s0 + $0x28] sm:$0xff]
  %v38 = vld [vmem:[%s0 + $0x30] sm:$0xff]
  %v39 = vld [vmem:[%s0 + $0x38] sm:$0xff]
  %v40 = vld [vmem:[%s0 + $0x40] sm:$0xff]
  %v41 = vld [vmem:[%s0 + $0x48] sm:$0xff]
  %v42 = vld [vmem:[%s0 + $0x50] sm:$0xff]
  %v43 = vld [vmem:[%s0 + $0x58] sm:$0xff]
  %v44 = vld [vmem:[%s0 + $0x60] sm:$0xff]
  %v45 = vld [vmem:[%s0 + $0x68] sm:$0xff]
  %v46 = vld [vmem:[%s0 + $0x70] sm:$0xff]
  %v47 = vld [vmem:[%s0 + $0x78] sm:$0xff]
  %v48 = vld [vmem:[%s0 + $0x80] sm:$0xff]
  %v49 = vld [vmem:[%s0 + $0x88] sm:$0xff]
  %v50 = vld [vmem:[%s0 + $0x90] sm:$0xff]
  %v51 = vld [vmem:[%s0 + $0x98] sm:$0xff]
  %v52 = vld [vmem:[%s0 + $0xa0] sm:$0xff]
  %v53 = vld [vmem:[%s0 + $0xa8] sm:$0xff]
  %v54 = vld [vmem:[%s0 + $0xb0] sm:$0xff]
  %v55 = vld [vmem:[%s0 + $0xb8] sm:$0xff]
  %v56 = vld [vmem:[%s0 + $0xc0] sm:$0xff]
  %v57 = vld [vmem:[%s0 + $0xc8] sm:$0xff]
  %v58 = vld [vmem:[%s0 + $0xd0] sm:$0xff]
  %v59 = vld [vmem:[%s0 + $0xd8] sm:$0xff]
  %v60 = vld [vmem:[%s0 + $0xe0] sm:$0xff]
  %v61 = vld [vmem:[%s0 + $0xe8] sm:$0xff]
  %v62 = vld [vmem:[%s0 + $0xf0] sm:$0xff]
  %v63 = vld [vmem:[%s0 + $0xf8] sm:$0xff]
  %v64 = vld [vmem:[%s1] sm:$0xff]
  %v65 = vld [vmem:[%s1 + $0x8] sm:$0xff]
  %v66 = vld [vmem:[%s1 + $0x10] sm:$0xff]
  %v67 = vld [vmem:[%s1 + $0x18] sm:$0xff]
  %v68 = vld [vmem:[%s2] sm:$0xff]
  %v69 = vld [vmem:[%s2 + $0x8] sm:$0xff]
  %v70 = vld [vmem:[%s2 + $0x10] sm:$0xff]
  %v71 = vld [vmem:[%s2 + $0x18] sm:$0xff]
  %73 = vset.pattern.permute.xlu0 0
  %74 = vperm.xlu0 %73, %v68
  %v75 = vpop.permute.xlu0 %74
  %78 = vset.pattern.permute.xlu0 0
  %79 = vperm.xlu0 %78, %v69
  %v80 = vpop.permute.xlu0 %79
  %83 = vset.pattern.permute.xlu0 0
  %84 = vperm.xlu0 %83, %v70
  %v85 = vpop.permute.xlu0 %84
  %88 = vset.pattern.permute.xlu0 0
  %89 = vperm.xlu0 %88, %v71
  %v90 = vpop.permute.xlu0 %89
  %vm92 = vcmask 154624
  %v94 = vsel %vm92, %v64, 0
  %v97 = vsel %vm92, %v65, 0
  %v100 = vsel %vm92, %v66, 0
  %v103 = vsel %vm92, %v67, 0
  %v106 = vsel %vm92, %v32, 0
  %v109 = vsel %vm92, %v33, 0
  %v112 = vsel %vm92, %v34, 0
  %v115 = vsel %vm92, %v35, 0
  %v118 = vsel %vm92, %v36, 0
  %v121 = vsel %vm92, %v37, 0
  %v124 = vsel %vm92, %v38, 0
  %v127 = vsel %vm92, %v39, 0
  %v130 = vsel %vm92, %v40, 0
  %v133 = vsel %vm92, %v41, 0
  %v136 = vsel %vm92, %v42, 0
  %v139 = vsel %vm92, %v43, 0
  %v142 = vsel %vm92, %v44, 0
  %v145 = vsel %vm92, %v45, 0
  %v148 = vsel %vm92, %v46, 0
  %v151 = vsel %vm92, %v47, 0
  %v154 = vsel %vm92, %v48, 0
  %v157 = vsel %vm92, %v49, 0
  %v160 = vsel %vm92, %v50, 0
  %v163 = vsel %vm92, %v51, 0
  %v166 = vsel %vm92, %v52, 0
  %v169 = vsel %vm92, %v53, 0
  %v172 = vsel %vm92, %v54, 0
  %v175 = vsel %vm92, %v55, 0
  %v178 = vsel %vm92, %v56, 0
  %v181 = vsel %vm92, %v57, 0
  %v184 = vsel %vm92, %v58, 0
  %v187 = vsel %vm92, %v59, 0
  %v190 = vsel %vm92, %v60, 0
  %v193 = vsel %vm92, %v61, 0
  %v196 = vsel %vm92, %v62, 0
  %v199 = vsel %vm92, %v63, 0
  %201 = vmatprep.subr.mxu0 0.0
  %202 = vmatpush1.xpose.msra.mxu0 %v106
  %203 = vmatprep.subr.mxu0 0.0
  %204 = vmatpush1.xpose.msra.mxu0 %v109
  %205 = vmatprep.subr.mxu0 0.0
  %206 = vmatpush1.xpose.msra.mxu0 %v112
  %207 = vmatprep.subr.mxu0 0.0
  %208 = vmatpush1.xpose.msra.mxu0 %v115
  %209 = vmatprep.subr.mxu0 0.0
  %210 = vmatpush1.xpose.msra.mxu0 %v118
  %211 = vmatprep.subr.mxu0 0.0
  %212 = vmatpush1.xpose.msra.mxu0 %v121
  %213 = vmatprep.subr.mxu0 0.0
  %214 = vmatpush1.xpose.msra.mxu0 %v124
  %215 = vmatprep.subr.mxu0 0.0
  %216 = vmatpush1.xpose.msra.mxu0 %v127
  %217 = vmatprep.subr.mxu0 0.0
  %218 = vmatpush1.xpose.msra.mxu0 %v130
  %219 = vmatprep.subr.mxu0 0.0
  %220 = vmatpush1.xpose.msra.mxu0 %v133
  %221 = vmatprep.subr.mxu0 0.0
  %222 = vmatpush1.xpose.msra.mxu0 %v136
  %223 = vmatprep.subr.mxu0 0.0
  %224 = vmatpush1.xpose.msra.mxu0 %v139
  %225 = vmatprep.subr.mxu0 0.0
  %226 = vmatpush1.xpose.msra.mxu0 %v142
  %227 = vmatprep.subr.mxu0 0.0
  %228 = vmatpush1.xpose.msra.mxu0 %v145
  %229 = vmatprep.subr.mxu0 0.0
  %230 = vmatpush1.xpose.msra.mxu0 %v148
  %231 = vmatprep.subr.mxu0 0.0
  %232 = vmatpush1.xpose.msra.mxu0 %v151
  %233 = vmatprep.subr.mxu0 0.0
  %234 = vmatpush1.xpose.msra.mxu0 %v154
  %235 = vmatprep.subr.mxu0 0.0
  %236 = vmatpush1.xpose.msra.mxu0 %v157
  %237 = vmatprep.subr.mxu0 0.0
  %238 = vmatpush1.xpose.msra.mxu0 %v160
  %239 = vmatprep.subr.mxu0 0.0
  %240 = vmatpush1.xpose.msra.mxu0 %v163
  %241 = vmatprep.subr.mxu0 0.0
  %242 = vmatpush1.xpose.msra.mxu0 %v166
  %243 = vmatprep.subr.mxu0 0.0
  %244 = vmatpush1.xpose.msra.mxu0 %v169
  %245 = vmatprep.subr.mxu0 0.0
  %246 = vmatpush1.xpose.msra.mxu0 %v172
  %247 = vmatprep.subr.mxu0 0.0
  %248 = vmatpush1.xpose.msra.mxu0 %v175
  %249 = vmatprep.subr.mxu0 0.0
  %250 = vmatpush1.xpose.msra.mxu0 %v178
  %251 = vmatprep.subr.mxu0 0.0
  %252 = vmatpush1.xpose.msra.mxu0 %v181
  %253 = vmatprep.subr.mxu0 0.0
  %254 = vmatpush1.xpose.msra.mxu0 %v184
  %255 = vmatprep.subr.mxu0 0.0
  %256 = vmatpush1.xpose.msra.mxu0 %v187
  %257 = vmatprep.subr.mxu0 0.0
  %258 = vmatpush1.xpose.msra.mxu0 %v190
  %259 = vmatprep.subr.mxu0 0.0
  %260 = vmatpush1.xpose.msra.mxu0 %v193
  %261 = vmatprep.subr.mxu0 0.0
  %262 = vmatpush1.xpose.msra.mxu0 %v196
  %263 = vmatprep.subr.mxu0 0.0
  %264 = vmatpush1.xpose.msra.mxu0 %v199
  %265 = vmatprep.mubr.f32.mxu0 0.0
  %266 = vmatmul.mubr.f32.gmra.mrb[0].mxu0 %v94
  %v267 = vpop.f32.mrb[0].mxu0
  %v268 = vadd.f32 %v75, %v267
  %v269 = vpop.f32.mrb[0].mxu0
  %v270 = vadd.f32 %v75, %v269
  %271 = vmatprep.mubr.f32.mxu0 0.0
  %272 = vmatmul.mubr.f32.gmra.mrb[0].mxu0 %v97
  %v273 = vpop.f32.mrb[0].mxu0
  %v274 = vadd.f32 %v80, %v273
  %v275 = vpop.f32.mrb[0].mxu0
  %v276 = vadd.f32 %v80, %v275
  %277 = vmatprep.mubr.f32.mxu0 0.0
  %278 = vmatmul.mubr.f32.gmra.mrb[0].mxu0 %v100
  %v279 = vpop.f32.mrb[0].mxu0
  %v280 = vadd.f32 %v85, %v279
  %v281 = vpop.f32.mrb[0].mxu0
  %v282 = vadd.f32 %v85, %v281
  %283 = vmatprep.mubr.f32.mxu0 0.0
  %284 = vmatmul.mubr.f32.gmra.mrb[0].mxu0 %v103
  %v285 = vpop.f32.mrb[0].mxu0
  %v286 = vadd.f32 %v90, %v285
  %v287 = vpop.f32.mrb[0].mxu0
  %v288 = vadd.f32 %v90, %v287
  %289 = vdwg.mxu0
  %v290 = vmul.f32 %v268, 0.01
  %v291 = vmul.f32 %v270, 0.01
  %v292 = vmul.f32 %v274, 0.01
  %v293 = vmul.f32 %v276, 0.01
  %v294 = vmul.f32 %v280, 0.01
  %v295 = vmul.f32 %v282, 0.01
  %v296 = vmul.f32 %v286, 0.01
  %v297 = vmul.f32 %v288, 0.01
  %v298 = vmax.f32 %v268, %v290
  %v299 = vmax.f32 %v270, %v291
  %v300 = vmax.f32 %v274, %v292
  %v301 = vmax.f32 %v276, %v293
  %v302 = vmax.f32 %v280, %v294
  %v303 = vmax.f32 %v282, %v295
  %v304 = vmax.f32 %v286, %v296
  %v305 = vmax.f32 %v288, %v297
  %v306 = vld [vmem:[%s3] sm:$0xff]
  %v307 = vld [vmem:[%s3 + $0x8] sm:$0xff]
  %v308 = vld [vmem:[%s3 + $0x10] sm:$0xff]
  %v309 = vld [vmem:[%s3 + $0x18] sm:$0xff]
  %v310 = vld [vmem:[%s3 + $0x20] sm:$0xff]
  %v311 = vld [vmem:[%s3 + $0x28] sm:$0xff]
  %v312 = vld [vmem:[%s3 + $0x30] sm:$0xff]
  %v313 = vld [vmem:[%s3 + $0x38] sm:$0xff]
  %v314 = vld [vmem:[%s4] sm:$0xff]
  %v315 = vld [vmem:[%s4 + $0x8] sm:$0xff]
  %v316 = vld [vmem:[%s4 + $0x10] sm:$0xff]
  %v317 = vld [vmem:[%s4 + $0x18] sm:$0xff]
  %v318 = vld [vmem:[%s4 + $0x20] sm:$0xff]
  %v319 = vld [vmem:[%s4 + $0x28] sm:$0xff]
  %v320 = vld [vmem:[%s4 + $0x30] sm:$0xff]
  %v321 = vld [vmem:[%s4 + $0x38] sm:$0xff]
  %323 = vset.pattern.permute.xlu0 0
  %324 = vperm.xlu0 %323, %v314
  %v325 = vpop.permute.xlu0 %324
  %328 = vset.pattern.permute.xlu0 0
  %329 = vperm.xlu0 %328, %v315
  %v330 = vpop.permute.xlu0 %329
  %333 = vset.pattern.permute.xlu0 0
  %334 = vperm.xlu0 %333, %v316
  %v335 = vpop.permute.xlu0 %334
  %338 = vset.pattern.permute.xlu0 0
  %339 = vperm.xlu0 %338, %v317
  %v340 = vpop.permute.xlu0 %339
  %343 = vset.pattern.permute.xlu0 0
  %344 = vperm.xlu0 %343, %v318
  %v345 = vpop.permute.xlu0 %344
  %348 = vset.pattern.permute.xlu0 0
  %349 = vperm.xlu0 %348, %v319
  %v350 = vpop.permute.xlu0 %349
  %353 = vset.pattern.permute.xlu0 0
  %354 = vperm.xlu0 %353, %v320
  %v355 = vpop.permute.xlu0 %354
  %358 = vset.pattern.permute.xlu0 0
  %359 = vperm.xlu0 %358, %v321
  %v360 = vpop.permute.xlu0 %359
  %vm362 = vcmask 261120
  %v364 = vsel %vm362, %v306, 0
  %v367 = vsel %vm362, %v307, 0
  %v370 = vsel %vm362, %v308, 0
  %v373 = vsel %vm362, %v309, 0
  %v376 = vsel %vm362, %v310, 0
  %v379 = vsel %vm362, %v311, 0
  %v382 = vsel %vm362, %v312, 0
  %v385 = vsel %vm362, %v313, 0
  %387 = vmatprep.subr.mxu0 %v299
  %388 = vmatpush1.msra.mxu0 %v298
  %389 = vmatprep.subr.mxu0 %v301
  %390 = vmatpush1.msra.mxu0 %v300
  %391 = vmatprep.subr.mxu0 %v303
  %392 = vmatpush1.msra.mxu0 %v302
  %393 = vmatprep.subr.mxu0 %v305
  %394 = vmatpush1.msra.mxu0 %v304
  %395 = vmatprep.subr.mxu0 0.0
  %396 = vmatpush1.msra.mxu0 0.0
  %397 = vmatprep.subr.mxu0 0.0
  %398 = vmatpush1.msra.mxu0 0.0
  %399 = vmatprep.subr.mxu0 0.0
  %400 = vmatpush1.msra.mxu0 0.0
  %401 = vmatprep.subr.mxu0 0.0
  %402 = vmatpush1.msra.mxu0 0.0
  %403 = vmatprep.subr.mxu0 0.0
  %404 = vmatpush1.msra.mxu0 0.0
  %405 = vmatprep.subr.mxu0 0.0
  %406 = vmatpush1.msra.mxu0 0.0
  %407 = vmatprep.subr.mxu0 0.0
  %408 = vmatpush1.msra.mxu0 0.0
  %409 = vmatprep.subr.mxu0 0.0
  %410 = vmatpush1.msra.mxu0 0.0
  %411 = vmatprep.subr.mxu0 0.0
  %412 = vmatpush1.msra.mxu0 0.0
  %413 = vmatprep.subr.mxu0 0.0
  %414 = vmatpush1.msra.mxu0 0.0
  %415 = vmatprep.subr.mxu0 0.0
  %416 = vmatpush1.msra.mxu0 0.0
  %417 = vmatprep.subr.mxu0 0.0
  %418 = vmatpush1.msra.mxu0 0.0
  %419 = vmatprep.subr.mxu0 0.0
  %420 = vmatpush1.msra.mxu0 0.0
  %421 = vmatprep.subr.mxu0 0.0
  %422 = vmatpush1.msra.mxu0 0.0
  %423 = vmatprep.subr.mxu0 0.0
  %424 = vmatpush1.msra.mxu0 0.0
  %425 = vmatprep.subr.mxu0 0.0
  %426 = vmatpush1.msra.mxu0 0.0
  %427 = vmatprep.subr.mxu0 0.0
  %428 = vmatpush1.msra.mxu0 0.0
  %429 = vmatprep.subr.mxu0 0.0
  %430 = vmatpush1.msra.mxu0 0.0
  %431 = vmatprep.subr.mxu0 0.0
  %432 = vmatpush1.msra.mxu0 0.0
  %433 = vmatprep.subr.mxu0 0.0
  %434 = vmatpush1.msra.mxu0 0.0
  %435 = vmatprep.subr.mxu0 0.0
  %436 = vmatpush1.msra.mxu0 0.0
  %437 = vmatprep.subr.mxu0 0.0
  %438 = vmatpush1.msra.mxu0 0.0
  %439 = vmatprep.subr.mxu0 0.0
  %440 = vmatpush1.msra.mxu0 0.0
  %441 = vmatprep.subr.mxu0 0.0
  %442 = vmatpush1.msra.mxu0 0.0
  %443 = vmatprep.subr.mxu0 0.0
  %444 = vmatpush1.msra.mxu0 0.0
  %445 = vmatprep.subr.mxu0 0.0
  %446 = vmatpush1.msra.mxu0 0.0
  %447 = vmatprep.subr.mxu0 0.0
  %448 = vmatpush1.msra.mxu0 0.0
  %449 = vmatprep.subr.mxu0 0.0
  %450 = vmatpush1.msra.mxu0 0.0
  %451 = vmatprep.mubr.f32.mxu0 0.0
  %452 = vmatmul.mubr.f32.gmra.mrb[0].mxu0 %v364
  %v453 = vpop.f32.mrb[0].mxu0
  %v454 = vadd.f32 %v325, %v453
  %v455 = vpop.f32.mrb[0].mxu0
  %v456 = vadd.f32 %v325, %v455
  %457 = vmatprep.mubr.f32.mxu0 0.0
  %458 = vmatmul.mubr.f32.gmra.mrb[0].mxu0 %v367
  %v459 = vpop.f32.mrb[0].mxu0
  %v460 = vadd.f32 %v330, %v459
  %v461 = vpop.f32.mrb[0].mxu0
  %v462 = vadd.f32 %v330, %v461
  %463 = vmatprep.mubr.f32.mxu0 0.0
  %464 = vmatmul.mubr.f32.gmra.mrb[0].mxu0 %v370
  %v465 = vpop.f32.mrb[0].mxu0
  %v466 = vadd.f32 %v335, %v465
  %v467 = vpop.f32.mrb[0].mxu0
  %v468 = vadd.f32 %v335, %v467
  %469 = vmatprep.mubr.f32.mxu0 0.0
  %470 = vmatmul.mubr.f32.gmra.mrb[0].mxu0 %v373
  %v471 = vpop.f32.mrb[0].mxu0
  %v472 = vadd.f32 %v340, %v471
  %v473 = vpop.f32.mrb[0].mxu0
  %v474 = vadd.f32 %v340, %v473
  %475 = vmatprep.mubr.f32.mxu0 0.0
  %476 = vmatmul.mubr.f32.gmra.mrb[0].mxu0 %v376
  %v477 = vpop.f32.mrb[0].mxu0
  %v478 = vadd.f32 %v345, %v477
  %v479 = vpop.f32.mrb[0].mxu0
  %v480 = vadd.f32 %v345, %v479
  %481 = vmatprep.mubr.f32.mxu0 0.0
  %482 = vmatmul.mubr.f32.gmra.mrb[0].mxu0 %v379
  %v483 = vpop.f32.mrb[0].mxu0
  %v484 = vadd.f32 %v350, %v483
  %v485 = vpop.f32.mrb[0].mxu0
  %v486 = vadd.f32 %v350, %v485
  %487 = vmatprep.mubr.f32.mxu0 0.0
  %488 = vmatmul.mubr.f32.gmra.mrb[0].mxu0 %v382
  %v489 = vpop.f32.mrb[0].mxu0
  %v490 = vadd.f32 %v355, %v489
  %v491 = vpop.f32.mrb[0].mxu0
  %v492 = vadd.f32 %v355, %v491
  %493 = vmatprep.mubr.f32.mxu0 0.0
  %494 = vmatmul.mubr.f32.gmra.mrb[0].mxu0 %v385
  %v495 = vpop.f32.mrb[0].mxu0
  %v496 = vadd.f32 %v360, %v495
  %v497 = vpop.f32.mrb[0].mxu0
  %v498 = vadd.f32 %v360, %v497
  %499 = vdwg.mxu0
  %v500 = vmul.f32 %v454, 0.01
  %v501 = vmul.f32 %v456, 0.01
  %v502 = vmul.f32 %v460, 0.01
  %v503 = vmul.f32 %v462, 0.01
  %v504 = vmul.f32 %v466, 0.01
  %v505 = vmul.f32 %v468, 0.01
  %v506 = vmul.f32 %v472, 0.01
  %v507 = vmul.f32 %v474, 0.01
  %v508 = vmul.f32 %v478, 0.01
  %v509 = vmul.f32 %v480, 0.01
  %v510 = vmul.f32 %v484, 0.01
  %v511 = vmul.f32 %v486, 0.01
  %v512 = vmul.f32 %v490, 0.01
  %v513 = vmul.f32 %v492, 0.01
  %v514 = vmul.f32 %v496, 0.01
  %v515 = vmul.f32 %v498, 0.01
  %v516 = vmax.f32 %v454, %v500
  %v517 = vmax.f32 %v456, %v501
  %v518 = vmax.f32 %v460, %v502
  %v519 = vmax.f32 %v462, %v503
  %v520 = vmax.f32 %v466, %v504
  %v521 = vmax.f32 %v468, %v505
  %v522 = vmax.f32 %v472, %v506
  %v523 = vmax.f32 %v474, %v507
  %v524 = vmax.f32 %v478, %v508
  %v525 = vmax.f32 %v480, %v509
  %v526 = vmax.f32 %v484, %v510
  %v527 = vmax.f32 %v486, %v511
  %v528 = vmax.f32 %v490, %v512
  %v529 = vmax.f32 %v492, %v513
  %v530 = vmax.f32 %v496, %v514
  %v531 = vmax.f32 %v498, %v515
  %v532 = vld [vmem:[%s5] sm:$0xff]
  %v533 = vld [vmem:[%s5 + $0x8] sm:$0xff]
  %v534 = vld [vmem:[%s5 + $0x10] sm:$0x3f]
  %v535 = vld [vmem:[%s6] sm:$0xff]
  %v536 = vld [vmem:[%s6 + $0x8] sm:$0xff]
  %v537 = vld [vmem:[%s6 + $0x10] sm:$0x3f]
  %539 = vset.pattern.permute.xlu0 0
  %540 = vperm.xlu0 %539, %v535
  %v541 = vpop.permute.xlu0 %540
  %544 = vset.pattern.permute.xlu0 0
  %545 = vperm.xlu0 %544, %v536
  %v546 = vpop.permute.xlu0 %545
  %549 = vset.pattern.permute.xlu0 0
  %550 = vperm.xlu0 %549, %v537
  %v551 = vpop.permute.xlu0 %550
  %vm553 = vcmask 523264
  %v555 = vsel %vm553, %v532, 0
  %v558 = vsel %vm553, %v533, 0
  %v561 = vsel %vm553, %v534, 0
  %563 = vmatprep.subr.mxu0 %v517
  %564 = vmatpush1.msra.mxu0 %v516
  %565 = vmatprep.subr.mxu0 %v519
  %566 = vmatpush1.msra.mxu0 %v518
  %567 = vmatprep.subr.mxu0 %v521
  %568 = vmatpush1.msra.mxu0 %v520
  %569 = vmatprep.subr.mxu0 %v523
  %570 = vmatpush1.msra.mxu0 %v522
  %571 = vmatprep.subr.mxu0 %v525
  %572 = vmatpush1.msra.mxu0 %v524
  %573 = vmatprep.subr.mxu0 %v527
  %574 = vmatpush1.msra.mxu0 %v526
  %575 = vmatprep.subr.mxu0 %v529
  %576 = vmatpush1.msra.mxu0 %v528
  %577 = vmatprep.subr.mxu0 %v531
  %578 = vmatpush1.msra.mxu0 %v530
  %579 = vmatprep.subr.mxu0 0.0
  %580 = vmatpush1.msra.mxu0 0.0
  %581 = vmatprep.subr.mxu0 0.0
  %582 = vmatpush1.msra.mxu0 0.0
  %583 = vmatprep.subr.mxu0 0.0
  %584 = vmatpush1.msra.mxu0 0.0
  %585 = vmatprep.subr.mxu0 0.0
  %586 = vmatpush1.msra.mxu0 0.0
  %587 = vmatprep.subr.mxu0 0.0
  %588 = vmatpush1.msra.mxu0 0.0
  %589 = vmatprep.subr.mxu0 0.0
  %590 = vmatpush1.msra.mxu0 0.0
  %591 = vmatprep.subr.mxu0 0.0
  %592 = vmatpush1.msra.mxu0 0.0
  %593 = vmatprep.subr.mxu0 0.0
  %594 = vmatpush1.msra.mxu0 0.0
  %595 = vmatprep.subr.mxu0 0.0
  %596 = vmatpush1.msra.mxu0 0.0
  %597 = vmatprep.subr.mxu0 0.0
  %598 = vmatpush1.msra.mxu0 0.0
  %599 = vmatprep.subr.mxu0 0.0
  %600 = vmatpush1.msra.mxu0 0.0
  %601 = vmatprep.subr.mxu0 0.0
  %602 = vmatpush1.msra.mxu0 0.0
  %603 = vmatprep.subr.mxu0 0.0
  %604 = vmatpush1.msra.mxu0 0.0
  %605 = vmatprep.subr.mxu0 0.0
  %606 = vmatpush1.msra.mxu0 0.0
  %607 = vmatprep.subr.mxu0 0.0
  %608 = vmatpush1.msra.mxu0 0.0
  %609 = vmatprep.subr.mxu0 0.0
  %610 = vmatpush1.msra.mxu0 0.0
  %611 = vmatprep.subr.mxu0 0.0
  %612 = vmatpush1.msra.mxu0 0.0
  %613 = vmatprep.subr.mxu0 0.0
  %614 = vmatpush1.msra.mxu0 0.0
  %615 = vmatprep.subr.mxu0 0.0
  %616 = vmatpush1.msra.mxu0 0.0
  %617 = vmatprep.subr.mxu0 0.0
  %618 = vmatpush1.msra.mxu0 0.0
  %619 = vmatprep.subr.mxu0 0.0
  %620 = vmatpush1.msra.mxu0 0.0
  %621 = vmatprep.subr.mxu0 0.0
  %622 = vmatpush1.msra.mxu0 0.0
  %623 = vmatprep.subr.mxu0 0.0
  %624 = vmatpush1.msra.mxu0 0.0
  %625 = vmatprep.subr.mxu0 0.0
  %626 = vmatpush1.msra.mxu0 0.0
  %627 = vmatprep.mubr.f32.mxu0 0.0
  %628 = vmatmul.mubr.f32.gmra.mrb[0].mxu0 %v555
  %v629 = vpop.f32.mrb[0].mxu0
  %v630 = vadd.f32 %v541, %v629
  %v631 = vpop.f32.mrb[0].mxu0
  %v632 = vadd.f32 %v541, %v631
  %633 = vmatprep.mubr.f32.mxu0 0.0
  %634 = vmatmul.mubr.f32.gmra.mrb[0].mxu0 %v558
  %v635 = vpop.f32.mrb[0].mxu0
  %v636 = vadd.f32 %v546, %v635
  %v637 = vpop.f32.mrb[0].mxu0
  %v638 = vadd.f32 %v546, %v637
  %639 = vmatprep.mubr.f32.mxu0 0.0
  %640 = vmatmul.mubr.f32.gmra.mrb[0].mxu0 %v561
  %v641 = vpop.f32.mrb[0].mxu0
  %v642 = vadd.f32 %v551, %v641
  %v643 = vpop.f32.mrb[0].mxu0
  %v644 = vadd.f32 %v551, %v643
  %645 = vdwg.mxu0
  %v646 = vmul.f32 %v630, 0.01
  %v647 = vmul.f32 %v632, 0.01
  %v648 = vmul.f32 %v636, 0.01
  %v649 = vmul.f32 %v638, 0.01
  %v650 = vmul.f32 %v642, 0.01
  %v651 = vmul.f32 %v644, 0.01
  %v652 = vmax.f32 %v630, %v646
  %v653 = vmax.f32 %v632, %v647
  %v654 = vmax.f32 %v636, %v648
  %v655 = vmax.f32 %v638, %v649
  %v656 = vmax.f32 %v642, %v650
  %v657 = vmax.f32 %v644, %v651
  %v658 = vld [vmem:[%s7] sm:$0x3]
  %v659 = vld [vmem:[%s8] sm:$0x3]
  %661 = vset.pattern.permute.xlu0 0
  %662 = vperm.xlu0 %661, %v659
  %v663 = vpop.permute.xlu0 %662
  %vm665 = vcmask 179200
  %v667 = vsel %vm665, %v658, 0
  %vm669 = vcmask 1045504
  %v671 = vsel %vm669, %v656, 0
  %v674 = vsel %vm669, %v657, 0
  %676 = vmatprep.subr.mxu0 %v653
  %677 = vmatpush1.msra.mxu0 %v652
  %678 = vmatprep.subr.mxu0 %v655
  %679 = vmatpush1.msra.mxu0 %v654
  %680 = vmatprep.subr.mxu0 %v674
  %681 = vmatpush1.msra.mxu0 %v671
  %682 = vmatprep.subr.mxu0 0.0
  %683 = vmatpush1.msra.mxu0 0.0
  %684 = vmatprep.subr.mxu0 0.0
  %685 = vmatpush1.msra.mxu0 0.0
  %686 = vmatprep.subr.mxu0 0.0
  %687 = vmatpush1.msra.mxu0 0.0
  %688 = vmatprep.subr.mxu0 0.0
  %689 = vmatpush1.msra.mxu0 0.0
  %690 = vmatprep.subr.mxu0 0.0
  %691 = vmatpush1.msra.mxu0 0.0
  %692 = vmatprep.subr.mxu0 0.0
  %693 = vmatpush1.msra.mxu0 0.0
  %694 = vmatprep.subr.mxu0 0.0
  %695 = vmatpush1.msra.mxu0 0.0
  %696 = vmatprep.subr.mxu0 0.0
  %697 = vmatpush1.msra.mxu0 0.0
  %698 = vmatprep.subr.mxu0 0.0
  %699 = vmatpush1.msra.mxu0 0.0
  %700 = vmatprep.subr.mxu0 0.0
  %701 = vmatpush1.msra.mxu0 0.0
  %702 = vmatprep.subr.mxu0 0.0
  %703 = vmatpush1.msra.mxu0 0.0
  %704 = vmatprep.subr.mxu0 0.0
  %705 = vmatpush1.msra.mxu0 0.0
  %706 = vmatprep.subr.mxu0 0.0
  %707 = vmatpush1.msra.mxu0 0.0
  %708 = vmatprep.subr.mxu0 0.0
  %709 = vmatpush1.msra.mxu0 0.0
  %710 = vmatprep.subr.mxu0 0.0
  %711 = vmatpush1.msra.mxu0 0.0
  %712 = vmatprep.subr.mxu0 0.0
  %713 = vmatpush1.msra.mxu0 0.0
  %714 = vmatprep.subr.mxu0 0.0
  %715 = vmatpush1.msra.mxu0 0.0
  %716 = vmatprep.subr.mxu0 0.0
  %717 = vmatpush1.msra.mxu0 0.0
  %718 = vmatprep.subr.mxu0 0.0
  %719 = vmatpush1.msra.mxu0 0.0
  %720 = vmatprep.subr.mxu0 0.0
  %721 = vmatpush1.msra.mxu0 0.0
  %722 = vmatprep.subr.mxu0 0.0
  %723 = vmatpush1.msra.mxu0 0.0
  %724 = vmatprep.subr.mxu0 0.0
  %725 = vmatpush1.msra.mxu0 0.0
  %726 = vmatprep.subr.mxu0 0.0
  %727 = vmatpush1.msra.mxu0 0.0
  %728 = vmatprep.subr.mxu0 0.0
  %729 = vmatpush1.msra.mxu0 0.0
  %730 = vmatprep.subr.mxu0 0.0
  %731 = vmatpush1.msra.mxu0 0.0
  %732 = vmatprep.subr.mxu0 0.0
  %733 = vmatpush1.msra.mxu0 0.0
  %734 = vmatprep.subr.mxu0 0.0
  %735 = vmatpush1.msra.mxu0 0.0
  %736 = vmatprep.subr.mxu0 0.0
  %737 = vmatpush1.msra.mxu0 0.0
  %738 = vmatprep.subr.mxu0 0.0
  %739 = vmatpush1.msra.mxu0 0.0
  %740 = vmatprep.mubr.f32.mxu0 0.0
  %741 = vmatmul.mubr.f32.gmra.mrb[0].mxu0 %v667
  %v742 = vpop.f32.mrb[0].mxu0
  %v743 = vadd.f32 %v663, %v742
  %v744 = vpop.f32.mrb[0].mxu0
  %v745 = vadd.f32 %v663, %v744
  %746 = vdwg.mxu0
  %v749 = vcombine.low %v743, %v745
  %v751 = vunpack.c.l.s4 1983009808
  %v752 = vunpack.c.0.s8 %v751
  %v753 = vlaneseq
  %v754 = vshrl.u32 %v753, 7
  %v755 = vsub.s32 %v752, %v754
  %v756 = vrot.slane %v749, %v755
  %758 = vst [vmem:[%s9] sm:$0xf] %v756
  // Predicated region
  $region38: #{binary_classification_forward.1} parent=0 // pred_check
    _
  $region39: #{binary_classification_forward.1} parent=0 // pred_check_branch
    %760 = sbr.rel (0) target = $region41
  $region40: #{binary_classification_forward.1} parent=0 // pred_region
    _
  $region41: #{binary_classification_forward.1} parent=0 // pred_fallthru
    _
  // Predicated region
  $region42: #{binary_classification_forward.1} parent=0 // pred_check
    _
  $region43: #{binary_classification_forward.1} parent=0 // pred_check_branch
    %762 = sbr.rel (0) target = $region45
  $region44: #{binary_classification_forward.1} parent=0 // pred_region
    _
  $region45: #{binary_classification_forward.1} parent=0 // pred_fallthru
    _

</llo_original>
